<compile_context>
chip_gen: v7x
topology: tpu7x:2x2x1
jax: 0.10.0
libtpu: 0.0.40
codegen_flags: <defaults>
</compile_context>

<pallas_src>
import jax
import jax.numpy as jnp
from jax.experimental import pallas as pl
from jax.experimental.pallas import tpu as pltpu


SCALE_FACTOR = 1.6791767923989418


def _round_up(a: int, b: int) -> int:
    return ((a + b - 1) // b) * b


def _pick_block_budget():
    """(target_block_bytes, vmem_limit_cap) by TPU generation.

    Conservative default (v7x-class, 64 MiB VMEM) if the query fails.
    """
    try:
        info = pltpu.get_tpu_info()
        cap = int(getattr(info, "vmem_capacity_bytes", 64 << 20))
    except Exception:
        cap = 64 << 20
    if cap >= (100 << 20):          # v5e / v6e: 128 MiB physical VMEM
        return 16 << 20, 96 << 20
    return 8 << 20, 48 << 20        # v7x: 64 MiB physical VMEM


def _pick_tile_rows(rows: int, lane: int, itemsize: int, target_block_bytes: int) -> int:
    """Rows per block: byte budget, >= 4 grid steps on large inputs, 8-row aligned."""
    if rows <= 8:
        return rows                 # single block; first dim == full array dim
    budget_rows = max(8, (target_block_bytes // (lane * itemsize)) // 8 * 8)
    quarter_rows = _round_up(pl.cdiv(rows, 4), 8)   # >= 2 steps per TC on v7x
    return max(8, min(budget_rows, quarter_rows))


def scaled_silu_kernel(x_ref, o_ref):
    # f32 compute in-register (safe on v5e); single EUP push (tanh) per element.
    x = x_ref[...].astype(jnp.float32)
    y = x * (1.0 + jnp.tanh(x * 0.5)) * (0.5 * SCALE_FACTOR)
    o_ref[...] = y.astype(o_ref.dtype)


def _scaled_silu_2d(x2, tile_rows: int, vmem_limit_bytes: int):
    rows, lane = x2.shape
    grid = pl.cdiv(rows, tile_rows)     # partial last block is masked by Pallas
    return pl.pallas_call(
        scaled_silu_kernel,
        out_shape=jax.ShapeDtypeStruct((rows, lane), x2.dtype),
        grid_spec=pltpu.PrefetchScalarGridSpec(
            num_scalar_prefetch=0,
            grid=(grid,),
            in_specs=[pl.BlockSpec((tile_rows, lane), lambda i: (i, 0))],
            out_specs=pl.BlockSpec((tile_rows, lane), lambda i: (i, 0)),
        ),
        compiler_params=pltpu.CompilerParams(
            dimension_semantics=("parallel",),
            vmem_limit_bytes=int(vmem_limit_bytes),
        ),
    )(x2)


def _scaled_silu_jnp(x):
    # Plain-XLA fallback for tiny / ragged remainders (already at HBM roofline).
    xf = x.astype(jnp.float32)
    return (xf * jax.nn.sigmoid(xf) * SCALE_FACTOR).astype(x.dtype)


def scaled_silu(x):
    """ScaledSiLU over an arbitrary-shaped tensor via a lane-dense 2D kernel."""
    orig_shape = x.shape
    n = x.size
    if n == 0:
        return x
    dtype = x.dtype
    itemsize = jnp.dtype(dtype).itemsize
    target_block_bytes, vmem_cap = _pick_block_budget()
    flat = x.reshape(-1)

    # Common case: element count divisible by a multiple of 128 -> no padding,
    # no slicing, just free reshapes around the kernel.
    lane = next((c for c in (1024, 512, 256, 128) if n % c == 0), None)
    if lane is not None:
        rows = n // lane
        tile_rows = _pick_tile_rows(rows, lane, itemsize, target_block_bytes)
        tile_bytes = tile_rows * lane * itemsize
        vmem_limit = min(max(4 * tile_bytes + (4 << 20), 16 << 20), vmem_cap)
        out2 = _scaled_silu_2d(flat.reshape(rows, lane), tile_rows, vmem_limit)
        return out2.reshape(orig_shape)

    # Ragged case: kernel on the 128-divisible bulk, plain jnp on the <128 tail.
    lane = 128
    n_bulk = (n // lane) * lane
    if n_bulk == 0:
        return _scaled_silu_jnp(flat).reshape(orig_shape)
    rows = n_bulk // lane
    tile_rows = _pick_tile_rows(rows, lane, itemsize, target_block_bytes)
    tile_bytes = tile_rows * lane * itemsize
    vmem_limit = min(max(4 * tile_bytes + (4 << 20), 16 << 20), vmem_cap)
    bulk_out = _scaled_silu_2d(flat[:n_bulk].reshape(rows, lane), tile_rows, vmem_limit)
    tail_out = _scaled_silu_jnp(flat[n_bulk:])
    return jnp.concatenate([bulk_out.reshape(-1), tail_out]).reshape(orig_shape)


def scaled_silu_ref(x):
    """Pure-JAX reference mirroring the PyTorch forward."""
    xf = x.astype(jnp.float32)
    return (xf * jax.nn.sigmoid(xf) * SCALE_FACTOR).astype(x.dtype)


if __name__ == "__main__":
    key = jax.random.PRNGKey(0)
    k1, k2, k3, k4, k5 = jax.random.split(key, 5)

    # Main test: spec-sized 4D tensor (divisible path, single block).
    x = jax.random.normal(k1, (2, 4, 16, 16), dtype=jnp.float32)
    out = jax.block_until_ready(scaled_silu(x))
    assert out.shape == x.shape and out.dtype == x.dtype
    assert jnp.allclose(out, scaled_silu_ref(x), atol=1e-4, rtol=1e-4)

    # Medium tensor: multi-step grid with a masked partial last block (no row padding).
    x_med = jax.random.normal(k2, (260, 512), dtype=jnp.float32)
    out_med = jax.block_until_ready(scaled_silu(x_med))
    assert jnp.allclose(out_med, scaled_silu_ref(x_med), atol=1e-4, rtol=1e-4)

    # Odd tiny shape (< 128 elements): pure-jnp fallback path.
    x_odd = jax.random.normal(k3, (3, 5, 7), dtype=jnp.float32)
    out_odd = jax.block_until_ready(scaled_silu(x_odd))
    assert jnp.allclose(out_odd, scaled_silu_ref(x_odd), atol=1e-4, rtol=1e-4)

    # Ragged but >= 128 elements: kernel on the bulk + jnp tail.
    x_rag = jax.random.normal(k4, (5, 130), dtype=jnp.float32)
    out_rag = jax.block_until_ready(scaled_silu(x_rag))
    assert jnp.allclose(out_rag, scaled_silu_ref(x_rag), atol=1e-4, rtol=1e-4)

    # bf16 I/O stays bf16 on HBM; compute is upcast to f32 in-register.
    x_bf16 = jax.random.normal(k5, (8, 32), dtype=jnp.bfloat16)
    out_bf16 = jax.block_until_ready(scaled_silu(x_bf16))
    assert out_bf16.dtype == jnp.bfloat16
    assert jnp.allclose(
        out_bf16.astype(jnp.float32),
        scaled_silu_ref(x_bf16).astype(jnp.float32),
        atol=1e-2, rtol=1e-2,
    )

    print("KERNEL_OK")
</pallas_src>

<mosaic_0001>
module attributes {stable_mosaic.version = 11 : i64} {
  func.func @scaled_silu_kernel(%arg0: i32, %arg1: memref<2x1024xf32, #tpu.memory_space<vmem>>, %arg2: memref<2x1024xf32, #tpu.memory_space<vmem>>) attributes {dimension_semantics = [#tpu.dimension_semantics<parallel>], iteration_bounds = array<i64: 1>, scalar_prefetch = 0 : i64, scratch_operands = 0 : i64, tpu.core_type = #tpu.core_type<tc>, window_params = [{transform_indices = @transform_0, window_bounds = array<i64: 2, 1024>}, {transform_indices = @transform_1, window_bounds = array<i64: 2, 1024>}]} {
    %c0 = arith.constant 0 : index
    %c0_0 = arith.constant 0 : index
    %0 = vector.load %arg1[%c0, %c0_0] : memref<2x1024xf32, #tpu.memory_space<vmem>>, vector<2x1024xf32>
    %cst = arith.constant 5.000000e-01 : f32
    %1 = vector.broadcast %cst : f32 to vector<2x1024xf32>
    %2 = arith.mulf %0, %1 : vector<2x1024xf32>
    %3 = math.tanh %2 : vector<2x1024xf32>
    %cst_1 = arith.constant 1.000000e+00 : f32
    %4 = vector.broadcast %cst_1 : f32 to vector<2x1024xf32>
    %5 = arith.addf %4, %3 : vector<2x1024xf32>
    %6 = arith.mulf %0, %5 : vector<2x1024xf32>
    %cst_2 = arith.constant 0.839588404 : f32
    %7 = vector.broadcast %cst_2 : f32 to vector<2x1024xf32>
    %8 = arith.mulf %6, %7 : vector<2x1024xf32>
    %c0_3 = arith.constant 0 : index
    %c0_4 = arith.constant 0 : index
    %9 = vector.load %arg2[%c0_3, %c0_4] : memref<2x1024xf32, #tpu.memory_space<vmem>>, vector<2x1024xf32>
    tpu.vector_store %arg2[%c0_3, %c0_4], %8 {strides = array<i32>} : memref<2x1024xf32, #tpu.memory_space<vmem>>, vector<2x1024xf32>,
    return
  }
  func.func @transform_0(%arg0: i32) -> (i32, i32) {
    %c0_i32 = arith.constant 0 : i32
    %c0_i32_0 = arith.constant 0 : i32
    return %arg0, %c0_i32 : i32, i32
  }
  func.func @transform_1(%arg0: i32) -> (i32, i32) {
    %c0_i32 = arith.constant 0 : i32
    %c0_i32_0 = arith.constant 0 : i32
    return %arg0, %c0_i32 : i32, i32
  }
}

</mosaic_0001>

<llo_original>
// kernel: tpu_custom_call.1
$region0: #{tpu_custom_call.1}
  #allocation0 [shape = 'u32[]', space=smem, size = 0x4, offset = 0x4, fixed_abs, tag = 'smem constant byte address 0x4 - core index']
  #allocation1 [shape = 'u32[144,128]{1,0:T(1,128)}', space=vmem, size = 0x12000, scoped, tag = 'internal scratch']
  %s0 = inlined_call_operand.hbm [shape: f32[2,1024], index: 0, kind: input, shape index: {}]
  %s1 = inlined_call_operand.hbm [shape: f32[2,1024], index: 1, kind: output, shape index: {}]
  %s2 = sld [smem:[#allocation0]]
  $region18: #{tpu_custom_call.1} parent=0
    _
  %s4 = ssub.s32 1, %s2
  %s5 = scalar_select 0, %s4, %s2
  $region1: #{tpu_custom_call.1} parent=0
    #allocation2 [shape = 'u8[8192]{0}', space=vmem, size = 0x2000, scoped, tag = 'input window, operand 0, single buffered']
    #allocation3 [shape = 's32[1]{0}', space=sflag, size = 0x4, scoped, tag = 'scoped memory for tpu_custom_call.1']
    #allocation4 [shape = 's32[1]{0}', space=sflag, size = 0x4, scoped, tag = 'scoped memory for tpu_custom_call.1']
    #allocation5 [shape = 'u8[8192]{0}', space=vmem, size = 0x2000, scoped, tag = 'output window, operand 0, single buffered']
    %6 = vsyncpa [#allocation3], 0
    %7 = vsyncpa [#allocation4], 0
    // Predicated region
    $region2: #{tpu_custom_call.1} parent=1 // pred_check
      _
    $region3: #{tpu_custom_call.1} parent=1 // pred_check_branch
      %9 = sbr.rel (0) target = $region5
    $region4: #{tpu_custom_call.1} parent=1 // pred_region
      %s11 = ssub.s32 256, 256
      %12 = vsyncadd [#allocation3], %s11
      %s14 = sshll.u32 [#allocation2], 4
      %s15 = int_to_ptr.vmem [resolvable:$true] %s14
      %17 = dma.hbm_to_vmem [thread:$0]  %s0, 256, %s15, [#allocation3]
    $region5: #{tpu_custom_call.1} parent=1 // pred_fallthru
      _
    // Predicated region
    $region6: #{tpu_custom_call.1} parent=1 // pred_check
      _
    $region7: #{tpu_custom_call.1} parent=1 // pred_check_branch
      %19 = sbr.rel (0) target = $region9
    $region8: #{tpu_custom_call.1} parent=1 // pred_region
      %20 = dma.done [#allocation3], 256
    $region9: #{tpu_custom_call.1} parent=1 // pred_fallthru
      _
    %v21 = vld [vmem:[#allocation2] sm:$0xff]
    %v22 = vld [vmem:[#allocation2 + $0x8] sm:$0xff]
    %v23 = vmul.f32 %v21, 0.5
    %v24 = vmul.f32 %v22, 0.5
    %v25 = vtanh.pop %v23
    %v26 = vtanh.pop %v24
    %v27 = vadd.f32 %v25, 1.0
    %v28 = vadd.f32 %v26, 1.0
    %v29 = vmul.f32 %v21, %v27
    %v30 = vmul.f32 %v22, %v28
    %v31 = vmul.f32 %v29, 0.8395884
    %v32 = vmul.f32 %v30, 0.8395884
    %33 = vst [vmem:[#allocation5] sm:$0xff] %v31
    %34 = vst [vmem:[#allocation5 + $0x8] sm:$0xff] %v32
    // Predicated region
    $region10: #{tpu_custom_call.1} parent=1 // pred_check
      _
    $region11: #{tpu_custom_call.1} parent=1 // pred_check_branch
      %36 = sbr.rel (0) target = $region13
    $region12: #{tpu_custom_call.1} parent=1 // pred_region
      %s38 = ssub.s32 256, 256
      %39 = vsyncadd [#allocation4], %s38
      %s41 = sshll.u32 [#allocation5], 4
      %s42 = int_to_ptr.vmem [resolvable:$true] %s41
      %44 = dma.vmem_to_hbm [thread:$0]  %s42, 256, %s1, [#allocation4]
    $region13: #{tpu_custom_call.1} parent=1 // pred_fallthru
      _
    // Predicated region
    $region14: #{tpu_custom_call.1} parent=1 // pred_check
      _
    $region15: #{tpu_custom_call.1} parent=1 // pred_check_branch
      %46 = sbr.rel (0) target = $region17
    $region16: #{tpu_custom_call.1} parent=1 // pred_region
      %47 = dma.done [#allocation4], 256
    $region17: #{tpu_custom_call.1} parent=1 // pred_fallthru
      _
    %48 = vsyncpa [#allocation3], 1
    %49 = vsyncpa [#allocation4], 1

</llo_original>
